<compile_context>
chip_gen: v5e
topology: v5e:2x2
jax: 0.10.0
libtpu: 0.0.40
codegen_flags: <defaults>
</compile_context>

<pallas_src>
import jax
import jax.numpy as jnp
from jax import lax
from jax.experimental import pallas as pl
from jax.experimental.pallas import tpu as pltpu
import numpy as np

ADD_VALUE = 0.5
MULTIPLY_VALUE = 2.0
IN_CHANNELS = 32
OUT_CHANNELS = 16
KERNEL_SIZE = 4
STRIDE = 2

_GELU_OUT_SCALE = 0.5 * MULTIPLY_VALUE   # == 1.0 for this module


def _round_up(x, m):
    return ((x + m - 1) // m) * m


def _make_kernel(nb, wp, lc):
    """Kernel processing `nb` images per grid step.

    Per image: build the phase-decomposed im2col matrix (4*Cin, lc) from four
    flat lane shifts of the padded/flattened image, run one bf16 MXU GEMM
    against the (4*Cout, 4*Cin) weight matrix with f32 accumulation, then the
    fused bias + min(.,0) + tanh-GELU + scale tail, storing bf16.
    """
    # Contraction row-block order (a, b) = (0,0), (0,1), (1,0), (1,1):
    # flat input offset for (a, b) is (1-a)*wp + (1-b).
    offs = (wp + 1, wp, 1, 0)

    def kernel(w_ref, b_ref, x_ref, o_ref):
        w = w_ref[...]            # (4*Cout, 4*Cin) bf16, resident across steps
        b = b_ref[...]            # (4*Cout, 1) f32, bias with ADD_VALUE folded in
        for j in range(nb):       # static unroll -> full scheduler visibility
            xj = x_ref[j]         # (Cin, L_pad) bf16: one padded, flattened image
            x4 = jnp.concatenate([xj[:, o:o + lc] for o in offs], axis=0)
            v = jnp.dot(w, x4, preferred_element_type=jnp.float32) + b
            v = jnp.minimum(v, 0.0)
            t = jnp.tanh(0.7978845608 * (v + 0.044715 * (v * v * v)))
            if _GELU_OUT_SCALE == 1.0:
                v = v * (1.0 + t)                       # 0.5 * mult folded away
            else:
                v = v * (_GELU_OUT_SCALE * (1.0 + t))
            o_ref[j] = v.astype(o_ref.dtype)

    return kernel


def fused_conv_transpose_postop(x, weight, bias):
    """x: (N, Cin, H, W) f32; weight: (Cin, Cout, K, K) (PyTorch ConvTranspose2d
    layout); bias: (Cout,).  Returns (N, Cout, OH, OW) f32 (NCHW)."""
    N, Cin, H, W = x.shape
    Cout = weight.shape[1]
    K, s = KERNEL_SIZE, STRIDE
    assert K == 4 and s == 2 and weight.shape == (Cin, Cout, K, K), \
        "phase decomposition below is specialized to K=4, stride=2, padding=0"
    Hp, Wp = H + 2, W + 2            # spatially padded input
    H1, W1 = H + 1, W + 1            # per-phase output grid; OH = 2*H1, OW = 2*W1
    OH, OW = 2 * H1, 2 * W1
    L = Hp * Wp                      # flattened padded image length
    Lc = H1 * Wp                     # GEMM columns per image (1 junk col per row)
    L_pad = _round_up(L + 1, 128)    # +1 covers the (a=0,b=0) shift of the last col
    NROWS = 4 * Cout                 # GEMM rows:    (ph, pw, co)
    KD = 4 * Cin                     # contraction:  (a, b, ci)

    # ---- prep: cast + zero-pad + flatten (single cheap XLA pass, no 4x blowup)
    xp = jnp.pad(x.astype(jnp.bfloat16), ((0, 0), (0, 0), (1, 1), (1, 1)))
    xflat = xp.reshape(N, Cin, L)
    xflat = jnp.pad(xflat, ((0, 0), (0, 0), (0, L_pad - L)))

    # ---- batch blocking: ~4 MB of block bytes, several even grid steps for
    # large batches (v7x megacore), a single block for tiny test batches.
    per_n_bytes = Cin * L_pad * 2 + NROWS * Lc * 2
    nb_cap = int(max(1, min(16, (4 << 20) // per_n_bytes)))
    if N <= nb_cap:
        nb, n_pad = N, N
    else:
        nb = nb_cap
        n_pad = _round_up(N, nb)
        xflat = jnp.pad(xflat, ((0, n_pad - N), (0, 0), (0, 0)))
    grid = n_pad // nb

    # ---- weights: (ci, co, kh, kw), kh = 2a+ph, kw = 2b+pw
    #      -> rows (ph, pw, co), cols (a, b, ci)
    w6 = weight.reshape(Cin, Cout, 2, 2, 2, 2)           # (ci, co, a, ph, b, pw)
    w_t = w6.transpose(3, 5, 1, 2, 4, 0).reshape(NROWS, KD).astype(jnp.bfloat16)
    # Bias with ADD_VALUE folded in, one value per GEMM row (ph, pw, co).
    b_col = (jnp.tile(bias.astype(jnp.float32), 4) + ADD_VALUE).reshape(NROWS, 1)

    cost = pl.CostEstimate(
        flops=2 * NROWS * KD * Lc * n_pad,
        transcendentals=NROWS * Lc * n_pad,
        bytes_accessed=(int(w_t.size) * 2 + int(b_col.size) * 4
                        + n_pad * Cin * L_pad * 2 + n_pad * NROWS * Lc * 2),
    )

    out_g = pl.pallas_call(
        _make_kernel(nb, Wp, Lc),
        out_shape=jax.ShapeDtypeStruct((n_pad, NROWS, Lc), jnp.bfloat16),
        grid=(grid,),
        in_specs=[
            pl.BlockSpec((NROWS, KD), lambda i: (0, 0)),          # weights (resident)
            pl.BlockSpec((NROWS, 1), lambda i: (0, 0)),           # bias + add_value
            pl.BlockSpec((nb, Cin, L_pad), lambda i: (i, 0, 0)),  # padded images
        ],
        out_specs=pl.BlockSpec((nb, NROWS, Lc), lambda i: (i, 0, 0)),
        compiler_params=pltpu.CompilerParams(
            dimension_semantics=("parallel",)),
        cost_estimate=cost,
    )(w_t, b_col, xflat)

    # ---- un-phase: (n, (ph,pw,co), (q,rp)) -> NCHW.  All reshapes are free
    # splits/merges; the only data pass is the transpose fused with the f32 cast.
    g = out_g[:N].reshape(N, 2, 2, Cout, H1, Wp)[..., :W1]   # (n, ph, pw, co, q, r)
    y = g.transpose(0, 3, 4, 1, 5, 2)                        # (n, co, q, ph, r, pw)
    return y.reshape(N, Cout, OH, OW).astype(jnp.float32)


def _reference(x, weight, bias):
    # Pure-JAX (f32, exact) reference of the PyTorch forward.
    K = KERNEL_SIZE
    w_conv = jnp.flip(weight, axis=(2, 3)).transpose(1, 0, 2, 3)  # (Cout,Cin,K,K)
    y = lax.conv_general_dilated(
        x, w_conv,
        window_strides=(1, 1),
        padding=[(K - 1, K - 1), (K - 1, K - 1)],
        lhs_dilation=(STRIDE, STRIDE),
        dimension_numbers=("NCHW", "OIHW", "NCHW"),
    ) + bias.reshape(1, -1, 1, 1)
    v = y + ADD_VALUE
    v = jnp.minimum(v, 0.0)
    v = v * 0.5 * (1.0 + jnp.tanh(0.7978845608 * (v + 0.044715 * v * v * v)))
    return v * MULTIPLY_VALUE


if __name__ == "__main__":
    key = jax.random.PRNGKey(0)
    kx, kw, kb = jax.random.split(key, 3)

    # Small deterministic inputs / parameters.
    N, H, W = 2, 8, 8
    x = jax.random.normal(kx, (N, IN_CHANNELS, H, W), dtype=jnp.float32)
    weight = 0.05 * jax.random.normal(
        kw, (IN_CHANNELS, OUT_CHANNELS, KERNEL_SIZE, KERNEL_SIZE),
        dtype=jnp.float32)
    bias = 0.1 * jax.random.normal(kb, (OUT_CHANNELS,), dtype=jnp.float32)

    fused = jax.jit(fused_conv_transpose_postop)
    out = jax.block_until_ready(fused(x, weight, bias))

    ref = jax.block_until_ready(_reference(x, weight, bias))
    assert out.shape == (N, OUT_CHANNELS, (H - 1) * STRIDE + KERNEL_SIZE,
                         (W - 1) * STRIDE + KERNEL_SIZE), out.shape
    # Tolerance accounts for bf16 GEMM operands (f32 accumulation) and the
    # bf16 kernel output (negligible: |y| <= ~0.4).
    np.testing.assert_allclose(np.asarray(out), np.asarray(ref),
                               rtol=2e-2, atol=1e-2)

    print("KERNEL_OK")
</pallas_src>

<mosaic_0001>
module attributes {stable_mosaic.version = 11 : i64} {
  func.func @kernel(%arg0: i32, %arg1: memref<64x128xbf16, #tpu.memory_space<vmem>>, %arg2: memref<64x1xf32, #tpu.memory_space<vmem>>, %arg3: memref<2x32x128xbf16, #tpu.memory_space<vmem>>, %arg4: memref<2x64x90xbf16, #tpu.memory_space<vmem>>) attributes {dimension_semantics = [#tpu.dimension_semantics<parallel>], iteration_bounds = array<i64: 1>, scalar_prefetch = 0 : i64, scratch_operands = 0 : i64, tpu.core_type = #tpu.core_type<tc>, window_params = [{pipeline_mode = #tpu.pipeline_mode<synchronous>, transform_indices = @transform_0, window_bounds = array<i64: 64, 128>}, {pipeline_mode = #tpu.pipeline_mode<synchronous>, transform_indices = @transform_1, window_bounds = array<i64: 64, 1>}, {transform_indices = @transform_2, window_bounds = array<i64: 2, 32, 128>}, {transform_indices = @transform_3, window_bounds = array<i64: 2, 64, 90>}]} {
    %c0 = arith.constant 0 : index
    %c0_0 = arith.constant 0 : index
    %0 = vector.load %arg1[%c0, %c0_0] : memref<64x128xbf16, #tpu.memory_space<vmem>>, vector<64x128xbf16>
    %c0_1 = arith.constant 0 : index
    %c0_2 = arith.constant 0 : index
    %1 = vector.load %arg2[%c0_1, %c0_2] : memref<64x1xf32, #tpu.memory_space<vmem>>, vector<64x1xf32>
    %c0_3 = arith.constant 0 : index
    %c0_4 = arith.constant 0 : index
    %c0_5 = arith.constant 0 : index
    %2 = vector.load %arg3[%c0_3, %c0_4, %c0_5] : memref<2x32x128xbf16, #tpu.memory_space<vmem>>, vector<1x32x128xbf16>
    %3 = vector.shape_cast %2 : vector<1x32x128xbf16> to vector<32x128xbf16>
    %4 = vector.extract_strided_slice %3 {offsets = [0, 11], sizes = [32, 90], strides = [1, 1]} : vector<32x128xbf16> to vector<32x90xbf16>
    %5 = vector.extract_strided_slice %3 {offsets = [0, 10], sizes = [32, 90], strides = [1, 1]} : vector<32x128xbf16> to vector<32x90xbf16>
    %6 = vector.extract_strided_slice %3 {offsets = [0, 1], sizes = [32, 90], strides = [1, 1]} : vector<32x128xbf16> to vector<32x90xbf16>
    %7 = vector.extract_strided_slice %3 {offsets = [0, 0], sizes = [32, 90], strides = [1, 1]} : vector<32x128xbf16> to vector<32x90xbf16>
    %8 = tpu.concatenate %4, %5, %6, %7 in 0 : vector<32x90xbf16>, vector<32x90xbf16>, vector<32x90xbf16>, vector<32x90xbf16> -> vector<128x90xbf16>
    %cst = arith.constant dense<0.000000e+00> : vector<64x90xf32>
    %9 = tpu.matmul %0, %8, %cst {dimension_numbers = #tpu.dot_dimension_numbers<[1], [0], [0], [1], [0, 0, 1, 1], [], []>} : vector<64x128xbf16>, vector<128x90xbf16>, vector<64x90xf32> -> vector<64x90xf32>
    %10 = vector.broadcast %1 : vector<64x1xf32> to vector<64x90xf32>
    %11 = arith.addf %9, %10 : vector<64x90xf32>
    %cst_6 = arith.constant 0.000000e+00 : f32
    %12 = vector.broadcast %cst_6 : f32 to vector<64x90xf32>
    %13 = arith.minimumf %11, %12 : vector<64x90xf32>
    %14 = arith.mulf %13, %13 : vector<64x90xf32>
    %15 = arith.mulf %14, %13 : vector<64x90xf32>
    %cst_7 = arith.constant 4.471500e-02 : f32
    %16 = vector.broadcast %cst_7 : f32 to vector<64x90xf32>
    %17 = arith.mulf %16, %15 : vector<64x90xf32>
    %18 = arith.addf %13, %17 : vector<64x90xf32>
    %cst_8 = arith.constant 0.797884583 : f32
    %19 = vector.broadcast %cst_8 : f32 to vector<64x90xf32>
    %20 = arith.mulf %19, %18 : vector<64x90xf32>
    %21 = math.tanh %20 : vector<64x90xf32>
    %cst_9 = arith.constant 1.000000e+00 : f32
    %22 = vector.broadcast %cst_9 : f32 to vector<64x90xf32>
    %23 = arith.addf %22, %21 : vector<64x90xf32>
    %24 = arith.mulf %13, %23 : vector<64x90xf32>
    %25 = arith.truncf %24 : vector<64x90xf32> to vector<64x90xbf16>
    %c0_10 = arith.constant 0 : index
    %c0_11 = arith.constant 0 : index
    %c0_12 = arith.constant 0 : index
    %26 = vector.load %arg4[%c0_10, %c0_11, %c0_12] : memref<2x64x90xbf16, #tpu.memory_space<vmem>>, vector<1x64x90xbf16>
    %27 = vector.shape_cast %26 : vector<1x64x90xbf16> to vector<64x90xbf16>
    %28 = vector.shape_cast %25 : vector<64x90xbf16> to vector<1x64x90xbf16>
    tpu.vector_store %arg4[%c0_10, %c0_11, %c0_12], %28 {strides = array<i32>} : memref<2x64x90xbf16, #tpu.memory_space<vmem>>, vector<1x64x90xbf16>,
    %c1 = arith.constant 1 : index
    %c0_13 = arith.constant 0 : index
    %c0_14 = arith.constant 0 : index
    %29 = vector.load %arg3[%c1, %c0_13, %c0_14] : memref<2x32x128xbf16, #tpu.memory_space<vmem>>, vector<1x32x128xbf16>
    %30 = vector.shape_cast %29 : vector<1x32x128xbf16> to vector<32x128xbf16>
    %31 = vector.extract_strided_slice %30 {offsets = [0, 11], sizes = [32, 90], strides = [1, 1]} : vector<32x128xbf16> to vector<32x90xbf16>
    %32 = vector.extract_strided_slice %30 {offsets = [0, 10], sizes = [32, 90], strides = [1, 1]} : vector<32x128xbf16> to vector<32x90xbf16>
    %33 = vector.extract_strided_slice %30 {offsets = [0, 1], sizes = [32, 90], strides = [1, 1]} : vector<32x128xbf16> to vector<32x90xbf16>
    %34 = vector.extract_strided_slice %30 {offsets = [0, 0], sizes = [32, 90], strides = [1, 1]} : vector<32x128xbf16> to vector<32x90xbf16>
    %35 = tpu.concatenate %31, %32, %33, %34 in 0 : vector<32x90xbf16>, vector<32x90xbf16>, vector<32x90xbf16>, vector<32x90xbf16> -> vector<128x90xbf16>
    %cst_15 = arith.constant dense<0.000000e+00> : vector<64x90xf32>
    %36 = tpu.matmul %0, %35, %cst_15 {dimension_numbers = #tpu.dot_dimension_numbers<[1], [0], [0], [1], [0, 0, 1, 1], [], []>} : vector<64x128xbf16>, vector<128x90xbf16>, vector<64x90xf32> -> vector<64x90xf32>
    %37 = vector.broadcast %1 : vector<64x1xf32> to vector<64x90xf32>
    %38 = arith.addf %36, %37 : vector<64x90xf32>
    %cst_16 = arith.constant 0.000000e+00 : f32
    %39 = vector.broadcast %cst_16 : f32 to vector<64x90xf32>
    %40 = arith.minimumf %38, %39 : vector<64x90xf32>
    %41 = arith.mulf %40, %40 : vector<64x90xf32>
    %42 = arith.mulf %41, %40 : vector<64x90xf32>
    %cst_17 = arith.constant 4.471500e-02 : f32
    %43 = vector.broadcast %cst_17 : f32 to vector<64x90xf32>
    %44 = arith.mulf %43, %42 : vector<64x90xf32>
    %45 = arith.addf %40, %44 : vector<64x90xf32>
    %cst_18 = arith.constant 0.797884583 : f32
    %46 = vector.broadcast %cst_18 : f32 to vector<64x90xf32>
    %47 = arith.mulf %46, %45 : vector<64x90xf32>
    %48 = math.tanh %47 : vector<64x90xf32>
    %cst_19 = arith.constant 1.000000e+00 : f32
    %49 = vector.broadcast %cst_19 : f32 to vector<64x90xf32>
    %50 = arith.addf %49, %48 : vector<64x90xf32>
    %51 = arith.mulf %40, %50 : vector<64x90xf32>
    %52 = arith.truncf %51 : vector<64x90xf32> to vector<64x90xbf16>
    %c1_20 = arith.constant 1 : index
    %c0_21 = arith.constant 0 : index
    %c0_22 = arith.constant 0 : index
    %53 = vector.load %arg4[%c1_20, %c0_21, %c0_22] : memref<2x64x90xbf16, #tpu.memory_space<vmem>>, vector<1x64x90xbf16>
    %54 = vector.shape_cast %53 : vector<1x64x90xbf16> to vector<64x90xbf16>
    %55 = vector.shape_cast %52 : vector<64x90xbf16> to vector<1x64x90xbf16>
    tpu.vector_store %arg4[%c1_20, %c0_21, %c0_22], %55 {strides = array<i32>} : memref<2x64x90xbf16, #tpu.memory_space<vmem>>, vector<1x64x90xbf16>,
    return
  }
  func.func @transform_0(%arg0: i32) -> (i32, i32) {
    %c0_i32 = arith.constant 0 : i32
    %c0_i32_0 = arith.constant 0 : i32
    %c0_i32_1 = arith.constant 0 : i32
    return %c0_i32, %c0_i32_0 : i32, i32
  }
  func.func @transform_1(%arg0: i32) -> (i32, i32) {
    %c0_i32 = arith.constant 0 : i32
    %c0_i32_0 = arith.constant 0 : i32
    %c0_i32_1 = arith.constant 0 : i32
    return %c0_i32, %c0_i32_0 : i32, i32
  }
  func.func @transform_2(%arg0: i32) -> (i32, i32, i32) {
    %c0_i32 = arith.constant 0 : i32
    %c0_i32_0 = arith.constant 0 : i32
    %c0_i32_1 = arith.constant 0 : i32
    return %arg0, %c0_i32, %c0_i32_0 : i32, i32, i32
  }
  func.func @transform_3(%arg0: i32) -> (i32, i32, i32) {
    %c0_i32 = arith.constant 0 : i32
    %c0_i32_0 = arith.constant 0 : i32
    %c0_i32_1 = arith.constant 0 : i32
    return %arg0, %c0_i32, %c0_i32_0 : i32, i32, i32
  }
}

</mosaic_0001>

<llo_original>
// kernel: fused_conv_transpose_postop.1
$region0: #{fused_conv_transpose_postop.1}
  #allocation0 [shape = 'u32[]', space=smem, size = 0x4, offset = 0x4, fixed_abs, tag = 'smem constant byte address 0x4 - core index']
  #allocation1 [shape = 'u32[72,128]{1,0:T(1,128)}', space=vmem, size = 0x9000, scoped, tag = 'internal scratch']
  %s0 = inlined_call_operand.vmem [shape: bf16[64,128], index: 0, kind: input, shape index: {}]
  %s1 = inlined_call_operand.vmem [shape: f32[64,1], index: 1, kind: input, shape index: {}]
  %s2 = inlined_call_operand.vmem [shape: bf16[2,32,128], index: 2, kind: input, shape index: {}]
  %s3 = inlined_call_operand.vmem [shape: bf16[2,64,90], index: 3, kind: output, shape index: {}]
  %s4 = sld [smem:[#allocation0]]
  $region22: #{fused_conv_transpose_postop.1} parent=0
    _
  %s6 = ssub.s32 1, %s4
  %s7 = scalar_select 0, %s6, %s4
  // Predicated region
  $region2: #{fused_conv_transpose_postop.1} parent=0 // pred_check
    _
  $region3: #{fused_conv_transpose_postop.1} parent=0 // pred_check_branch
    %9 = sbr.rel (0) target = $region5
  $region4: #{fused_conv_transpose_postop.1} parent=0 // pred_region
    _
  $region5: #{fused_conv_transpose_postop.1} parent=0 // pred_fallthru
    _
  // Predicated region
  $region6: #{fused_conv_transpose_postop.1} parent=0 // pred_check
    _
  $region7: #{fused_conv_transpose_postop.1} parent=0 // pred_check_branch
    %11 = sbr.rel (0) target = $region9
  $region8: #{fused_conv_transpose_postop.1} parent=0 // pred_region
    _
  $region9: #{fused_conv_transpose_postop.1} parent=0 // pred_fallthru
    _
  // Predicated region
  $region10: #{fused_conv_transpose_postop.1} parent=0 // pred_check
    _
  $region11: #{fused_conv_transpose_postop.1} parent=0 // pred_check_branch
    %13 = sbr.rel (0) target = $region13
  $region12: #{fused_conv_transpose_postop.1} parent=0 // pred_region
    _
  $region13: #{fused_conv_transpose_postop.1} parent=0 // pred_fallthru
    _
  %v14 = vld [vmem:[%s0] sm:$0xf]
  %v15 = vld [vmem:[%s0 + $0x4] sm:$0xf]
  %v16 = vld [vmem:[%s0 + $0x8] sm:$0xf]
  %v17 = vld [vmem:[%s0 + $0xc] sm:$0xf]
  %v18 = vld [vmem:[%s0 + $0x10] sm:$0xf]
  %v19 = vld [vmem:[%s0 + $0x14] sm:$0xf]
  %v20 = vld [vmem:[%s0 + $0x18] sm:$0xf]
  %v21 = vld [vmem:[%s0 + $0x1c] sm:$0xf]
  %v22 = vld [vmem:[%s1] sm:$0xff]
  %v23 = vld [vmem:[%s1 + $0x8] sm:$0xff]
  %v24 = vld [vmem:[%s1 + $0x10] sm:$0xff]
  %v25 = vld [vmem:[%s1 + $0x18] sm:$0xff]
  %v26 = vld [vmem:[%s1 + $0x20] sm:$0xff]
  %v27 = vld [vmem:[%s1 + $0x28] sm:$0xff]
  %v28 = vld [vmem:[%s1 + $0x30] sm:$0xff]
  %v29 = vld [vmem:[%s1 + $0x38] sm:$0xff]
  %v30 = vld [vmem:[%s2] sm:$0xf]
  %v31 = vld [vmem:[%s2 + $0x4] sm:$0xf]
  %v32 = vld [vmem:[%s2 + $0x8] sm:$0xf]
  %v33 = vld [vmem:[%s2 + $0xc] sm:$0xf]
  %v38 = vunpack.c.l.b16 %v30
  %v39 = vunpack.c.l.b16 %v31
  %v40 = vunpack.c.l.b16 %v32
  %v41 = vunpack.c.l.b16 %v33
  %v42 = vpack.c.b16 %v39, %v38
  %v43 = vpack.c.b16 %v41, %v40
  %44 = vrot.lane.b32.xlu0 %v42, 1
  %v45 = vpop.permute.xlu0 %44
  %46 = vrot.lane.b32.xlu0 %v43, 1
  %v47 = vpop.permute.xlu0 %46
  %48 = vrot.lane.b32.xlu0 %v42, 10
  %v49 = vpop.permute.xlu0 %48
  %50 = vrot.lane.b32.xlu0 %v43, 10
  %v51 = vpop.permute.xlu0 %50
  %52 = vrot.lane.b32.xlu0 %v42, 11
  %v53 = vpop.permute.xlu0 %52
  %54 = vrot.lane.b32.xlu0 %v43, 11
  %v55 = vpop.permute.xlu0 %54
  %57 = vset.pattern.permute.xlu0 0
  %58 = vperm.xlu0 %57, %v22
  %v59 = vpop.permute.xlu0 %58
  %62 = vset.pattern.permute.xlu0 0
  %63 = vperm.xlu0 %62, %v23
  %v64 = vpop.permute.xlu0 %63
  %67 = vset.pattern.permute.xlu0 0
  %68 = vperm.xlu0 %67, %v24
  %v69 = vpop.permute.xlu0 %68
  %72 = vset.pattern.permute.xlu0 0
  %73 = vperm.xlu0 %72, %v25
  %v74 = vpop.permute.xlu0 %73
  %77 = vset.pattern.permute.xlu0 0
  %78 = vperm.xlu0 %77, %v26
  %v79 = vpop.permute.xlu0 %78
  %82 = vset.pattern.permute.xlu0 0
  %83 = vperm.xlu0 %82, %v27
  %v84 = vpop.permute.xlu0 %83
  %87 = vset.pattern.permute.xlu0 0
  %88 = vperm.xlu0 %87, %v28
  %v89 = vpop.permute.xlu0 %88
  %92 = vset.pattern.permute.xlu0 0
  %93 = vperm.xlu0 %92, %v29
  %v94 = vpop.permute.xlu0 %93
  %v104 = vunpack.c.l.b16 %v14
  %v105 = vunpack.c.l.b16 %v15
  %v106 = vunpack.c.l.b16 %v16
  %v107 = vunpack.c.l.b16 %v17
  %v108 = vunpack.c.l.b16 %v18
  %v109 = vunpack.c.l.b16 %v19
  %v110 = vunpack.c.l.b16 %v20
  %v111 = vunpack.c.l.b16 %v21
  %v112 = vpack.c.b16 %v105, %v104
  %v113 = vpack.c.b16 %v107, %v106
  %v114 = vpack.c.b16 %v109, %v108
  %v115 = vpack.c.b16 %v111, %v110
  %120 = vrot.lane.b32.xlu0 %v42, 117
  %v121 = vpop.permute.xlu0 %120
  %122 = vrot.lane.b32.xlu0 %v43, 117
  %v123 = vpop.permute.xlu0 %122
  %124 = vrot.lane.b32.xlu0 %v45, 117
  %v125 = vpop.permute.xlu0 %124
  %126 = vrot.lane.b32.xlu0 %v47, 117
  %v127 = vpop.permute.xlu0 %126
  %128 = vrot.lane.b32.xlu0 %v49, 117
  %v129 = vpop.permute.xlu0 %128
  %130 = vrot.lane.b32.xlu0 %v51, 117
  %v131 = vpop.permute.xlu0 %130
  %132 = vrot.lane.b32.xlu0 %v53, 117
  %v133 = vpop.permute.xlu0 %132
  %134 = vrot.lane.b32.xlu0 %v55, 117
  %v135 = vpop.permute.xlu0 %134
  %144 = vmatpush.bf16.msra.mxu0 %v135
  %145 = vmatpush.bf16.msra.mxu0 %v133
  %146 = vmatpush.bf16.msra.mxu0 %v131
  %147 = vmatpush.bf16.msra.mxu0 %v129
  %148 = vmatpush.bf16.msra.mxu0 %v127
  %149 = vmatpush.bf16.msra.mxu0 %v125
  %150 = vmatpush.bf16.msra.mxu0 %v123
  %151 = vmatpush.bf16.msra.mxu0 %v121
  %152 = vmatmul.bf16.gmra.mxu0 %v112
  %v153 = vpop.f32.mrf.mxu0
  %v154 = vadd.f32 %v59, %v153
  %v155 = vpop.f32.mrf.mxu0
  %v156 = vadd.f32 %v64, %v155
  %157 = vmatmul.bf16.gmra.mxu0 %v113
  %v158 = vpop.f32.mrf.mxu0
  %v159 = vadd.f32 %v69, %v158
  %v160 = vpop.f32.mrf.mxu0
  %v161 = vadd.f32 %v74, %v160
  %162 = vmatmul.bf16.gmra.mxu0 %v114
  %v163 = vpop.f32.mrf.mxu0
  %v164 = vadd.f32 %v79, %v163
  %v165 = vpop.f32.mrf.mxu0
  %v166 = vadd.f32 %v84, %v165
  %167 = vmatmul.bf16.gmra.mxu0 %v115
  %v168 = vpop.f32.mrf.mxu0
  %v169 = vadd.f32 %v89, %v168
  %v170 = vpop.f32.mrf.mxu0
  %v171 = vadd.f32 %v94, %v170
  %172 = vdwg.mxu0
  %v173 = vmin.f32 %v154, 0.0
  %v174 = vmin.f32 %v156, 0.0
  %v175 = vmin.f32 %v159, 0.0
  %v176 = vmin.f32 %v161, 0.0
  %v177 = vmin.f32 %v164, 0.0
  %v178 = vmin.f32 %v166, 0.0
  %v179 = vmin.f32 %v169, 0.0
  %v180 = vmin.f32 %v171, 0.0
  %v181 = vmul.f32 %v173, %v173
  %v182 = vmul.f32 %v174, %v174
  %v183 = vmul.f32 %v175, %v175
  %v184 = vmul.f32 %v176, %v176
  %v185 = vmul.f32 %v177, %v177
  %v186 = vmul.f32 %v178, %v178
  %v187 = vmul.f32 %v179, %v179
  %v188 = vmul.f32 %v180, %v180
  %v189 = vmul.f32 %v181, %v173
  %v190 = vmul.f32 %v182, %v174
  %v191 = vmul.f32 %v183, %v175
  %v192 = vmul.f32 %v184, %v176
  %v193 = vmul.f32 %v185, %v177
  %v194 = vmul.f32 %v186, %v178
  %v195 = vmul.f32 %v187, %v179
  %v196 = vmul.f32 %v188, %v180
  %v197 = vmul.f32 %v189, 0.044715
  %v198 = vmul.f32 %v190, 0.044715
  %v199 = vmul.f32 %v191, 0.044715
  %v200 = vmul.f32 %v192, 0.044715
  %v201 = vmul.f32 %v193, 0.044715
  %v202 = vmul.f32 %v194, 0.044715
  %v203 = vmul.f32 %v195, 0.044715
  %v204 = vmul.f32 %v196, 0.044715
  %v205 = vadd.f32 %v173, %v197
  %v206 = vadd.f32 %v174, %v198
  %v207 = vadd.f32 %v175, %v199
  %v208 = vadd.f32 %v176, %v200
  %v209 = vadd.f32 %v177, %v201
  %v210 = vadd.f32 %v178, %v202
  %v211 = vadd.f32 %v179, %v203
  %v212 = vadd.f32 %v180, %v204
  %v213 = vmul.f32 %v205, 0.7978846
  %v214 = vmul.f32 %v206, 0.7978846
  %v215 = vmul.f32 %v207, 0.7978846
  %v216 = vmul.f32 %v208, 0.7978846
  %v217 = vmul.f32 %v209, 0.7978846
  %v218 = vmul.f32 %v210, 0.7978846
  %v219 = vmul.f32 %v211, 0.7978846
  %v220 = vmul.f32 %v212, 0.7978846
  %v221 = vtanh.pop %v213
  %v222 = vtanh.pop %v214
  %v223 = vtanh.pop %v215
  %v224 = vtanh.pop %v216
  %v225 = vtanh.pop %v217
  %v226 = vtanh.pop %v218
  %v227 = vtanh.pop %v219
  %v228 = vtanh.pop %v220
  %v229 = vadd.f32 %v221, 1.0
  %v230 = vadd.f32 %v222, 1.0
  %v231 = vadd.f32 %v223, 1.0
  %v232 = vadd.f32 %v224, 1.0
  %v233 = vadd.f32 %v225, 1.0
  %v234 = vadd.f32 %v226, 1.0
  %v235 = vadd.f32 %v227, 1.0
  %v236 = vadd.f32 %v228, 1.0
  %v237 = vmul.f32 %v173, %v229
  %v238 = vmul.f32 %v174, %v230
  %v239 = vmul.f32 %v175, %v231
  %v240 = vmul.f32 %v176, %v232
  %v241 = vmul.f32 %v177, %v233
  %v242 = vmul.f32 %v178, %v234
  %v243 = vmul.f32 %v179, %v235
  %v244 = vmul.f32 %v180, %v236
  %v245 = vpack.c.bf16 %v237, %v237
  %v246 = vpack.c.bf16 %v238, %v238
  %v247 = vpack.c.bf16 %v239, %v239
  %v248 = vpack.c.bf16 %v240, %v240
  %v249 = vpack.c.bf16 %v241, %v241
  %v250 = vpack.c.bf16 %v242, %v242
  %v251 = vpack.c.bf16 %v243, %v243
  %v252 = vpack.c.bf16 %v244, %v244
  %vm253 = vcmask 732160
  %254 = vst.msk [vmem:[%s3] sm:$0xf] %vm253, %v245
  %255 = vst.msk [vmem:[%s3 + $0x4] sm:$0xf] %vm253, %v246
  %256 = vst.msk [vmem:[%s3 + $0x8] sm:$0xf] %vm253, %v247
  %257 = vst.msk [vmem:[%s3 + $0xc] sm:$0xf] %vm253, %v248
  %258 = vst.msk [vmem:[%s3 + $0x10] sm:$0xf] %vm253, %v249
  %259 = vst.msk [vmem:[%s3 + $0x14] sm:$0xf] %vm253, %v250
  %260 = vst.msk [vmem:[%s3 + $0x18] sm:$0xf] %vm253, %v251
  %261 = vst.msk [vmem:[%s3 + $0x1c] sm:$0xf] %vm253, %v252
  %s262 = scalar_lea.vmem %s2, 16
  %v263 = vld [vmem:[%s262] sm:$0xf]
  %v264 = vld [vmem:[%s262 + $0x4] sm:$0xf]
  %v265 = vld [vmem:[%s262 + $0x8] sm:$0xf]
  %v266 = vld [vmem:[%s262 + $0xc] sm:$0xf]
  %v271 = vunpack.c.l.b16 %v263
  %v272 = vunpack.c.l.b16 %v264
  %v273 = vunpack.c.l.b16 %v265
  %v274 = vunpack.c.l.b16 %v266
  %v275 = vpack.c.b16 %v272, %v271
  %v276 = vpack.c.b16 %v274, %v273
  %277 = vrot.lane.b32.xlu0 %v275, 1
  %v278 = vpop.permute.xlu0 %277
  %279 = vrot.lane.b32.xlu0 %v276, 1
  %v280 = vpop.permute.xlu0 %279
  %281 = vrot.lane.b32.xlu0 %v275, 10
  %v282 = vpop.permute.xlu0 %281
  %283 = vrot.lane.b32.xlu0 %v276, 10
  %v284 = vpop.permute.xlu0 %283
  %285 = vrot.lane.b32.xlu0 %v275, 11
  %v286 = vpop.permute.xlu0 %285
  %287 = vrot.lane.b32.xlu0 %v276, 11
  %v288 = vpop.permute.xlu0 %287
  %289 = vrot.lane.b32.xlu0 %v275, 117
  %v290 = vpop.permute.xlu0 %289
  %291 = vrot.lane.b32.xlu0 %v276, 117
  %v292 = vpop.permute.xlu0 %291
  %293 = vrot.lane.b32.xlu0 %v278, 117
  %v294 = vpop.permute.xlu0 %293
  %295 = vrot.lane.b32.xlu0 %v280, 117
  %v296 = vpop.permute.xlu0 %295
  %297 = vrot.lane.b32.xlu0 %v282, 117
  %v298 = vpop.permute.xlu0 %297
  %299 = vrot.lane.b32.xlu0 %v284, 117
  %v300 = vpop.permute.xlu0 %299
  %301 = vrot.lane.b32.xlu0 %v286, 117
  %v302 = vpop.permute.xlu0 %301
  %303 = vrot.lane.b32.xlu0 %v288, 117
  %v304 = vpop.permute.xlu0 %303
  %313 = vmatpush.bf16.msra.mxu0 %v304
  %314 = vmatpush.bf16.msra.mxu0 %v302
  %315 = vmatpush.bf16.msra.mxu0 %v300
  %316 = vmatpush.bf16.msra.mxu0 %v298
  %317 = vmatpush.bf16.msra.mxu0 %v296
  %318 = vmatpush.bf16.msra.mxu0 %v294
  %319 = vmatpush.bf16.msra.mxu0 %v292
  %320 = vmatpush.bf16.msra.mxu0 %v290
  %321 = vmatmul.bf16.gmra.mxu0 %v112
  %v322 = vpop.f32.mrf.mxu0
  %v323 = vadd.f32 %v59, %v322
  %v324 = vpop.f32.mrf.mxu0
  %v325 = vadd.f32 %v64, %v324
  %326 = vmatmul.bf16.gmra.mxu0 %v113
  %v327 = vpop.f32.mrf.mxu0
  %v328 = vadd.f32 %v69, %v327
  %v329 = vpop.f32.mrf.mxu0
  %v330 = vadd.f32 %v74, %v329
  %331 = vmatmul.bf16.gmra.mxu0 %v114
  %v332 = vpop.f32.mrf.mxu0
  %v333 = vadd.f32 %v79, %v332
  %v334 = vpop.f32.mrf.mxu0
  %v335 = vadd.f32 %v84, %v334
  %336 = vmatmul.bf16.gmra.mxu0 %v115
  %v337 = vpop.f32.mrf.mxu0
  %v338 = vadd.f32 %v89, %v337
  %v339 = vpop.f32.mrf.mxu0
  %v340 = vadd.f32 %v94, %v339
  %341 = vdwg.mxu0
  %v342 = vmin.f32 %v323, 0.0
  %v343 = vmin.f32 %v325, 0.0
  %v344 = vmin.f32 %v328, 0.0
  %v345 = vmin.f32 %v330, 0.0
  %v346 = vmin.f32 %v333, 0.0
  %v347 = vmin.f32 %v335, 0.0
  %v348 = vmin.f32 %v338, 0.0
  %v349 = vmin.f32 %v340, 0.0
  %v350 = vmul.f32 %v342, %v342
  %v351 = vmul.f32 %v343, %v343
  %v352 = vmul.f32 %v344, %v344
  %v353 = vmul.f32 %v345, %v345
  %v354 = vmul.f32 %v346, %v346
  %v355 = vmul.f32 %v347, %v347
  %v356 = vmul.f32 %v348, %v348
  %v357 = vmul.f32 %v349, %v349
  %v358 = vmul.f32 %v350, %v342
  %v359 = vmul.f32 %v351, %v343
  %v360 = vmul.f32 %v352, %v344
  %v361 = vmul.f32 %v353, %v345
  %v362 = vmul.f32 %v354, %v346
  %v363 = vmul.f32 %v355, %v347
  %v364 = vmul.f32 %v356, %v348
  %v365 = vmul.f32 %v357, %v349
  %v366 = vmul.f32 %v358, 0.044715
  %v367 = vmul.f32 %v359, 0.044715
  %v368 = vmul.f32 %v360, 0.044715
  %v369 = vmul.f32 %v361, 0.044715
  %v370 = vmul.f32 %v362, 0.044715
  %v371 = vmul.f32 %v363, 0.044715
  %v372 = vmul.f32 %v364, 0.044715
  %v373 = vmul.f32 %v365, 0.044715
  %v374 = vadd.f32 %v342, %v366
  %v375 = vadd.f32 %v343, %v367
  %v376 = vadd.f32 %v344, %v368
  %v377 = vadd.f32 %v345, %v369
  %v378 = vadd.f32 %v346, %v370
  %v379 = vadd.f32 %v347, %v371
  %v380 = vadd.f32 %v348, %v372
  %v381 = vadd.f32 %v349, %v373
  %v382 = vmul.f32 %v374, 0.7978846
  %v383 = vmul.f32 %v375, 0.7978846
  %v384 = vmul.f32 %v376, 0.7978846
  %v385 = vmul.f32 %v377, 0.7978846
  %v386 = vmul.f32 %v378, 0.7978846
  %v387 = vmul.f32 %v379, 0.7978846
  %v388 = vmul.f32 %v380, 0.7978846
  %v389 = vmul.f32 %v381, 0.7978846
  %v390 = vtanh.pop %v382
  %v391 = vtanh.pop %v383
  %v392 = vtanh.pop %v384
  %v393 = vtanh.pop %v385
  %v394 = vtanh.pop %v386
  %v395 = vtanh.pop %v387
  %v396 = vtanh.pop %v388
  %v397 = vtanh.pop %v389
  %v398 = vadd.f32 %v390, 1.0
  %v399 = vadd.f32 %v391, 1.0
  %v400 = vadd.f32 %v392, 1.0
  %v401 = vadd.f32 %v393, 1.0
  %v402 = vadd.f32 %v394, 1.0
  %v403 = vadd.f32 %v395, 1.0
  %v404 = vadd.f32 %v396, 1.0
  %v405 = vadd.f32 %v397, 1.0
  %v406 = vmul.f32 %v342, %v398
  %v407 = vmul.f32 %v343, %v399
  %v408 = vmul.f32 %v344, %v400
  %v409 = vmul.f32 %v345, %v401
  %v410 = vmul.f32 %v346, %v402
  %v411 = vmul.f32 %v347, %v403
  %v412 = vmul.f32 %v348, %v404
  %v413 = vmul.f32 %v349, %v405
  %v414 = vpack.c.bf16 %v406, %v406
  %v415 = vpack.c.bf16 %v407, %v407
  %v416 = vpack.c.bf16 %v408, %v408
  %v417 = vpack.c.bf16 %v409, %v409
  %v418 = vpack.c.bf16 %v410, %v410
  %v419 = vpack.c.bf16 %v411, %v411
  %v420 = vpack.c.bf16 %v412, %v412
  %v421 = vpack.c.bf16 %v413, %v413
  %s422 = scalar_lea.vmem %s3, 32
  %423 = vst.msk [vmem:[%s422] sm:$0xf] %vm253, %v414
  %424 = vst.msk [vmem:[%s422 + $0x4] sm:$0xf] %vm253, %v415
  %425 = vst.msk [vmem:[%s422 + $0x8] sm:$0xf] %vm253, %v416
  %426 = vst.msk [vmem:[%s422 + $0xc] sm:$0xf] %vm253, %v417
  %427 = vst.msk [vmem:[%s422 + $0x10] sm:$0xf] %vm253, %v418
  %428 = vst.msk [vmem:[%s422 + $0x14] sm:$0xf] %vm253, %v419
  %429 = vst.msk [vmem:[%s422 + $0x18] sm:$0xf] %vm253, %v420
  %430 = vst.msk [vmem:[%s422 + $0x1c] sm:$0xf] %vm253, %v421
  // Predicated region
  $region14: #{fused_conv_transpose_postop.1} parent=0 // pred_check
    _
  $region15: #{fused_conv_transpose_postop.1} parent=0 // pred_check_branch
    %432 = sbr.rel (0) target = $region17
  $region16: #{fused_conv_transpose_postop.1} parent=0 // pred_region
    _
  $region17: #{fused_conv_transpose_postop.1} parent=0 // pred_fallthru
    _
  // Predicated region
  $region18: #{fused_conv_transpose_postop.1} parent=0 // pred_check
    _
  $region19: #{fused_conv_transpose_postop.1} parent=0 // pred_check_branch
    %434 = sbr.rel (0) target = $region21
  $region20: #{fused_conv_transpose_postop.1} parent=0 // pred_region
    _
  $region21: #{fused_conv_transpose_postop.1} parent=0 // pred_fallthru
    _

</llo_original>
